<compile_context>
chip_gen: v7x
topology: tpu7x:2x2x1
jax: 0.10.0
libtpu: 0.0.40
codegen_flags: <defaults>
</compile_context>

<pallas_src>
import functools

import jax
import jax.numpy as jnp
import numpy as np
from jax import lax
from jax.experimental import pallas as pl
from jax.experimental.pallas import tpu as pltpu


def _prescale_norm_kernel(g_ref, x_ref, o_ref, *, eps):
    # g_ref: (1,) f32 scalar in SMEM (loop-invariant parameter)
    # x_ref: (TR, hidden) input tile
    # o_ref: (TR, hidden) output tile
    x32 = x_ref[...].astype(jnp.float32)
    sumsq = jnp.sum(x32 * x32, axis=-1, keepdims=True)          # lane reduction (XLU)
    # g / max(sqrt(ss), eps) == g * min(rsqrt(ss), 1/eps)  (eps > 0); rsqrt -> EUP slot.
    scale = g_ref[0] * jnp.minimum(lax.rsqrt(sumsq), 1.0 / eps)  # (TR, 1)
    # Re-read x so the widened f32 tile is not live across the reduction.
    o_ref[...] = (x_ref[...].astype(jnp.float32) * scale).astype(o_ref.dtype)


def _prescale_scale_kernel(g_ref, x_ref, s_ref, *, eps):
    # Emits only the per-row scale (TR, 1); a consumer kernel applies it to x.
    x32 = x_ref[...].astype(jnp.float32)
    sumsq = jnp.sum(x32 * x32, axis=-1, keepdims=True)
    s_ref[...] = g_ref[0] * jnp.minimum(lax.rsqrt(sumsq), 1.0 / eps)


def _pick_row_tile(rows, hidden, itemsize, target_tile_bytes=4 << 20):
    """Largest multiple-of-8 row tile with one input buffer ~<= 4 MiB.

    Also keeps the grid >= 2 steps when rows allow, so dimension_semantics
    ("parallel",) can shard the row axis across v7x's 2 TensorCores.
    """
    bytes_per_row = max(1, hidden * itemsize)
    t = (target_tile_bytes // bytes_per_row) // 8 * 8
    t = int(max(8, min(t, rows)))
    if rows >= 16:
        t = min(t, max(8, (rows // 2 // 8) * 8))
    if t >= rows:
        return rows  # single full-extent block — exempt from (8,128) divisibility
    return t
    # TODO(synk): for extremely wide hidden the min-8-row tile can exceed the
    # VMEM budget; that case needs a hidden-chunked two-pass reduction.


_COMPILER_PARAMS = pltpu.CompilerParams(
    dimension_semantics=("parallel",),
    vmem_limit_bytes=48 << 20,   # fits v7x's 64 MiB/TC; > scoped defaults elsewhere
)


def _flatten(x):
    hidden = x.shape[-1]
    rows = int(np.prod(x.shape[:-1])) if x.ndim > 1 else 1
    return x.reshape(rows, hidden), rows, hidden


def prescale_norm_forward(x, g, eps=1e-5, fn=None):
    """Equivalent of PreScaleNorm.forward(x); `fn` applied afterwards in JAX."""
    orig_shape = x.shape
    x2, rows, hidden = _flatten(x)
    g1 = jnp.asarray(g, dtype=jnp.float32).reshape(1)

    row_tile = _pick_row_tile(rows, hidden, x2.dtype.itemsize)
    grid = (pl.cdiv(rows, row_tile),)

    out = pl.pallas_call(
        functools.partial(_prescale_norm_kernel, eps=eps),
        out_shape=jax.ShapeDtypeStruct((rows, hidden), x.dtype),
        grid=grid,
        in_specs=[
            pl.BlockSpec(memory_space=pltpu.MemorySpace.SMEM),   # g: SMEM scalar
            pl.BlockSpec((row_tile, hidden), lambda i: (i, 0)),  # x row tile
        ],
        out_specs=pl.BlockSpec((row_tile, hidden), lambda i: (i, 0)),
        compiler_params=_COMPILER_PARAMS,
    )(g1, x2)

    out = out.reshape(orig_shape)
    # TODO(synk): `self.fn` is an arbitrary wrapped submodule; it has no generic
    # Pallas equivalent, so it is applied here in plain JAX (identity in the demo).
    # For a Pallas consumer, prefer `prescale_norm_scale` + in-consumer scaling
    # to avoid the extra HBM round-trip of the normalized tensor.
    if fn is not None:
        out = fn(out)
    return out


def prescale_norm_scale(x, g, eps=1e-5):
    """Return only the per-row scale s with y = x * s  (shape x.shape[:-1] + (1,)).

    Structural optimization: a consumer kernel (fn) can apply this scale at its
    own load of x, eliminating the full write + re-read of y through HBM.
    """
    orig_shape = x.shape
    x2, rows, hidden = _flatten(x)
    g1 = jnp.asarray(g, dtype=jnp.float32).reshape(1)

    row_tile = _pick_row_tile(rows, hidden, x2.dtype.itemsize)
    grid = (pl.cdiv(rows, row_tile),)

    s = pl.pallas_call(
        functools.partial(_prescale_scale_kernel, eps=eps),
        out_shape=jax.ShapeDtypeStruct((rows, 1), jnp.float32),
        grid=grid,
        in_specs=[
            pl.BlockSpec(memory_space=pltpu.MemorySpace.SMEM),
            pl.BlockSpec((row_tile, hidden), lambda i: (i, 0)),
        ],
        out_specs=pl.BlockSpec((row_tile, 1), lambda i: (i, 0)),
        compiler_params=_COMPILER_PARAMS,
    )(g1, x2)

    return s.reshape(orig_shape[:-1] + (1,))


if __name__ == "__main__":
    batch, seq, hidden = 2, 8, 32
    eps = 1e-5

    key = jax.random.PRNGKey(0)
    x = jax.random.normal(key, (batch, seq, hidden), dtype=jnp.float32)

    # Learnable parameter g = nn.Parameter(torch.ones(1)) — init value.
    g = jnp.ones((1,), dtype=jnp.float32)

    out = prescale_norm_forward(x, g, eps=eps, fn=None)
    out = jax.block_until_ready(out)

    s = prescale_norm_scale(x, g, eps=eps)
    s = jax.block_until_ready(s)

    # Pure-numpy reference mirroring the torch forward exactly.
    x_np = np.asarray(x, dtype=np.float32)
    g_np = float(np.asarray(g)[0])
    n_ref = np.maximum(np.linalg.norm(x_np, axis=-1, keepdims=True), eps)
    ref = x_np / n_ref * g_np
    s_ref = g_np / n_ref

    # rsqrt path may differ from sqrt+divide by a few ulps.
    np.testing.assert_allclose(np.asarray(out), ref, rtol=1e-5, atol=1e-6)
    np.testing.assert_allclose(np.asarray(s), s_ref, rtol=1e-5, atol=1e-6)
    np.testing.assert_allclose(x_np * np.asarray(s), ref, rtol=1e-5, atol=1e-6)
    assert out.shape == x.shape and out.dtype == x.dtype
    print("KERNEL_OK")
</pallas_src>

<mosaic_0001>
module attributes {stable_mosaic.version = 11 : i64} {
  func.func @_prescale_norm_kernel(%arg0: i32, %arg1: memref<1xf32, #tpu.memory_space<smem>>, %arg2: memref<8x32xf32, #tpu.memory_space<vmem>>, %arg3: memref<8x32xf32, #tpu.memory_space<vmem>>) attributes {dimension_semantics = [#tpu.dimension_semantics<parallel>], iteration_bounds = array<i64: 2>, scalar_prefetch = 0 : i64, scratch_operands = 0 : i64, tpu.core_type = #tpu.core_type<tc>, window_params = [{transform_indices = @transform_0, window_bounds = array<i64: 1>}, {transform_indices = @transform_1, window_bounds = array<i64: 8, 32>}, {transform_indices = @transform_2, window_bounds = array<i64: 8, 32>}]} {
    %c0 = arith.constant 0 : index
    %c0_0 = arith.constant 0 : index
    %0 = vector.load %arg2[%c0, %c0_0] : memref<8x32xf32, #tpu.memory_space<vmem>>, vector<8x32xf32>
    %1 = arith.mulf %0, %0 : vector<8x32xf32>
    %cst = arith.constant dense<0.000000e+00> : vector<8xf32>
    %2 = vector.multi_reduction <add>, %1, %cst [1] : vector<8x32xf32> to vector<8xf32>
    %3 = vector.shape_cast %2 : vector<8xf32> to vector<8x1xf32>
    %c0_1 = arith.constant 0 : index
    %4 = memref.load %arg1[%c0_1] : memref<1xf32, #tpu.memory_space<smem>>
    %5 = math.rsqrt %3 : vector<8x1xf32>
    %cst_2 = arith.constant 1.000000e+05 : f32
    %6 = vector.broadcast %cst_2 : f32 to vector<8x1xf32>
    %7 = arith.minimumf %5, %6 : vector<8x1xf32>
    %8 = vector.broadcast %4 : f32 to vector<8x1xf32>
    %9 = arith.mulf %8, %7 : vector<8x1xf32>
    %c0_3 = arith.constant 0 : index
    %c0_4 = arith.constant 0 : index
    %10 = vector.load %arg2[%c0_3, %c0_4] : memref<8x32xf32, #tpu.memory_space<vmem>>, vector<8x32xf32>
    %11 = vector.broadcast %9 : vector<8x1xf32> to vector<8x32xf32>
    %12 = arith.mulf %10, %11 : vector<8x32xf32>
    %c0_5 = arith.constant 0 : index
    %c0_6 = arith.constant 0 : index
    %13 = vector.load %arg3[%c0_5, %c0_6] : memref<8x32xf32, #tpu.memory_space<vmem>>, vector<8x32xf32>
    tpu.vector_store %arg3[%c0_5, %c0_6], %12 {strides = array<i32>} : memref<8x32xf32, #tpu.memory_space<vmem>>, vector<8x32xf32>,
    return
  }
  func.func @transform_0(%arg0: i32) -> i32 {
    %c0_i32 = arith.constant 0 : i32
    %c0_i32_0 = arith.constant 0 : i32
    return %c0_i32 : i32
  }
  func.func @transform_1(%arg0: i32) -> (i32, i32) {
    %c0_i32 = arith.constant 0 : i32
    %c0_i32_0 = arith.constant 0 : i32
    return %arg0, %c0_i32 : i32, i32
  }
  func.func @transform_2(%arg0: i32) -> (i32, i32) {
    %c0_i32 = arith.constant 0 : i32
    %c0_i32_0 = arith.constant 0 : i32
    return %arg0, %c0_i32 : i32, i32
  }
}

</mosaic_0001>

<llo_original>
// kernel: tpu_custom_call.1
$region0: #{tpu_custom_call.1}
  #allocation0 [shape = 'u32[]', space=smem, size = 0x4, offset = 0x4, fixed_abs, tag = 'smem constant byte address 0x4 - core index']
  #allocation1 [shape = 'u32[144,128]{1,0:T(1,128)}', space=vmem, size = 0x12000, scoped, tag = 'internal scratch']
  #allocation2 [shape = 'f32[1]{0:T(128)S(6)}', space=smem, size = 0x200, scoped, tag = 'scoped memory for tpu_custom_call.1']
  %s0 = inlined_call_operand.<no memory space> [shape: f32[1], index: 0, kind: input, shape index: {}]
  %s1 = inlined_call_operand.hbm [shape: f32[16,32], index: 1, kind: input, shape index: {}]
  %s2 = inlined_call_operand.hbm [shape: f32[16,32], index: 2, kind: output, shape index: {}]
  %s3 = sld [smem:[#allocation0]]
  $region45: #{tpu_custom_call.1} parent=0
    _
  %s5 = ssub.s32 1, %s3
  %s6 = scalar_select 0, %s5, %s3
  %7 = sst [smem:[#allocation2]] %s0
  $region1: #{tpu_custom_call.1} parent=0
    #allocation3 [shape = 'u8[8192]{0}', space=vmem, size = 0x2000, scoped, tag = 'input window, operand 1']
    #allocation4 [shape = 's32[2]{0}', space=sflag, size = 0x8, scoped, tag = 'scoped memory for tpu_custom_call.1']
    #allocation5 [shape = 's32[2]{0}', space=sflag, size = 0x8, scoped, tag = 'scoped memory for tpu_custom_call.1']
    #allocation6 [shape = 'u8[8192]{0}', space=vmem, size = 0x2000, scoped, tag = 'output window, operand 0']
    %8 = vsyncpa [#allocation4], 0
    %s9 = scalar_lea.sflag [#allocation4], 1
    %10 = vsyncpa %s9, 0
    %11 = vsyncpa [#allocation5], 0
    %s12 = scalar_lea.sflag [#allocation5], 1
    %13 = vsyncpa %s12, 0
    loop: start=0, step=1, limit=4
    $region2: #{tpu_custom_call.1} parent=1 // loop_pre_header
      _
    $region3: #{tpu_custom_call.1} parent=1 // loop_header
      %s15 = sphi 0, %s19
      %p16 = scmp.ge.s32.totalorder %s15, 4
      %s23 = sphi 0, %s23
      %s25 = sphi 0, %s23
      %s26 = sphi 0, %s25
      %s40 = sphi 0, %s26
      %s46 = sphi 0, %s48
      %s49 = sphi 0, %s46
      %s50 = sphi 0, %s49
      %s66 = sphi 0, %s50
      %s72 = sphi 0, %s74
      %s75 = sphi 0, %s72
      %s76 = sphi 0, %s75
      %s92 = sphi 0, %s76
    $region4: #{tpu_custom_call.1} parent=1 // loop_header_branch
      %18 = sbr.rel (%p16) target = $region8
    $region5: #{tpu_custom_call.1} parent=1 // loop_body
      %s20 = ssub.s32 %s15, 1
      %s21 = ssub.s32 %s15, 2
      %s22 = sadd.s32 %s15, 1
      %s24 = sadd.s32 %s23, 1
      %p27 = scmp.eq.s32.totalorder %s15, 1
      %p28 = scmp.ne.s32.totalorder %s23, %s25
      %p29 = scmp.eq.s32.totalorder %s15, 0
      %p30 = por %p28, %p29
      %p31 = scmp.ne.s32.totalorder %s23, %s25
      %p32 = scmp.eq.s32.totalorder %s20, 1
      %p33 = por %p31, %p32
      %p34 = scmp.ne.s32.totalorder %s25, %s26
      %p35 = scmp.eq.s32.totalorder %s20, 0
      %p36 = por %p34, %p35
      %p37 = scmp.ne.s32.totalorder %s25, %s26
      %p38 = scmp.eq.s32.totalorder %s21, 1
      %p39 = por %p37, %p38
      %p41 = scmp.ne.s32.totalorder %s26, %s40
      %p42 = scmp.eq.s32.totalorder %s21, 0
      %p43 = por %p41, %p42
      %s44 = ssub.s32 %s15, %s22
      %p45 = scmp.eq.s32.totalorder %s44, 0
      %s47 = sadd.s32 %s46, 1
      %s48 = scalar_select %p45, %s46, %s47
      %p51 = pneg %p45
      %p52 = scmp.eq.s32.totalorder %s15, 1
      %p53 = por %p51, %p52
      %p54 = scmp.ne.s32.totalorder %s46, %s49
      %p55 = scmp.eq.s32.totalorder %s15, 0
      %p56 = por %p54, %p55
      %p57 = scmp.ne.s32.totalorder %s46, %s49
      %p58 = scmp.eq.s32.totalorder %s20, 1
      %p59 = por %p57, %p58
      %p60 = scmp.ne.s32.totalorder %s49, %s50
      %p61 = scmp.eq.s32.totalorder %s20, 0
      %p62 = por %p60, %p61
      %p63 = scmp.ne.s32.totalorder %s49, %s50
      %p64 = scmp.eq.s32.totalorder %s21, 1
      %p65 = por %p63, %p64
      %p67 = scmp.ne.s32.totalorder %s50, %s66
      %p68 = scmp.eq.s32.totalorder %s21, 0
      %p69 = por %p67, %p68
      %s70 = ssub.s32 %s15, %s22
      %p71 = scmp.eq.s32.totalorder %s70, 0
      %s73 = sadd.s32 %s72, 1
      %s74 = scalar_select %p71, %s72, %s73
      %p77 = pneg %p71
      %p78 = scmp.eq.s32.totalorder %s15, 1
      %p79 = por %p77, %p78
      %p80 = scmp.ne.s32.totalorder %s72, %s75
      %p81 = scmp.eq.s32.totalorder %s15, 0
      %p82 = por %p80, %p81
      %p83 = scmp.ne.s32.totalorder %s72, %s75
      %p84 = scmp.eq.s32.totalorder %s20, 1
      %p85 = por %p83, %p84
      %p86 = scmp.ne.s32.totalorder %s75, %s76
      %p87 = scmp.eq.s32.totalorder %s20, 0
      %p88 = por %p86, %p87
      %p89 = scmp.ne.s32.totalorder %s75, %s76
      %p90 = scmp.eq.s32.totalorder %s21, 1
      %p91 = por %p89, %p90
      %p93 = scmp.ne.s32.totalorder %s76, %s92
      %p94 = scmp.eq.s32.totalorder %s21, 0
      %p95 = por %p93, %p94
      %p96 = scmp.le.s32.totalorder 1, %s15
      %p97 = scmp.lt.s32.totalorder %s15, 3
      %p98 = pnand %p96, %p97
      %p99 = pneg %p98
      // Predicated region
      $region9: #{tpu_custom_call.1} parent=5 // pred_check
        _
      $region10: #{tpu_custom_call.1} parent=5 // pred_check_branch
        %101 = sbr.rel (%p98) target = $region12
      $region11: #{tpu_custom_call.1} parent=5 // pred_region
        %s102 = ssub.s32 %s15, 1
        // Predicated region
        $region13: #{tpu_custom_call.1} parent=11 // pred_check
          %p103 = pneg %p36
        $region14: #{tpu_custom_call.1} parent=11 // pred_check_branch
          %105 = sbr.rel (%p103) target = $region16
        $region15: #{tpu_custom_call.1} parent=11 // pred_region
          _
        $region16: #{tpu_custom_call.1} parent=11 // pred_fallthru
          _
      $region12: #{tpu_custom_call.1} parent=5 // pred_fallthru
        _
      %p106 = scmp.lt.s32.totalorder %s15, 2
      // Predicated region
      $region17: #{tpu_custom_call.1} parent=5 // pred_check
        %p107 = pneg %p106
      $region18: #{tpu_custom_call.1} parent=5 // pred_check_branch
        %109 = sbr.rel (%p107) target = $region20
      $region19: #{tpu_custom_call.1} parent=5 // pred_region
        // Predicated region
        $region21: #{tpu_custom_call.1} parent=19 // pred_check
          %p110 = pneg %p56
        $region22: #{tpu_custom_call.1} parent=19 // pred_check_branch
          %112 = sbr.rel (%p110) target = $region24
        $region23: #{tpu_custom_call.1} parent=19 // pred_region
          %s113 = sand.u32 %s46, 1
          %s114 = scalar_lea.sflag [#allocation4], %s113
          %s115 = sand.u32 %s46, 1
          %s116 = smul.addr %s115, 8
          %s117 = scalar_lea.vmem [#allocation3], %s116
          %s119 = ssub.s32 128, 128
          %120 = vsyncadd %s114, %s119
          %s121 = smul.addr %s15, 128
          %s122 = scalar_lea.hbm %s1, %s121
          %s124 = sshll.u32 %s117, 4
          %s125 = int_to_ptr.vmem [resolvable:$true] %s124
          %127 = dma.hbm_to_vmem [thread:$0]  %s122, 128, %s125, %s114
        $region24: #{tpu_custom_call.1} parent=19 // pred_fallthru
          _
      $region20: #{tpu_custom_call.1} parent=5 // pred_fallthru
        _
      %p128 = scmp.le.s32.totalorder 1, %s15
      %p129 = scmp.lt.s32.totalorder %s15, 3
      %p130 = pnand %p128, %p129
      %p131 = pneg %p130
      // Predicated region
      $region25: #{tpu_custom_call.1} parent=5 // pred_check
        _
      $region26: #{tpu_custom_call.1} parent=5 // pred_check_branch
        %133 = sbr.rel (%p130) target = $region28
      $region27: #{tpu_custom_call.1} parent=5 // pred_region
        %s134 = ssub.s32 %s15, 1
        %s135 = sand.u32 %s49, 1
        %s136 = scalar_lea.sflag [#allocation4], %s135
        %s137 = sand.u32 %s49, 1
        %s138 = smul.addr %s137, 8
        %s139 = scalar_lea.vmem [#allocation3], %s138
        // Predicated region
        $region29: #{tpu_custom_call.1} parent=27 // pred_check
          %p140 = pneg %p62
        $region30: #{tpu_custom_call.1} parent=27 // pred_check_branch
          %142 = sbr.rel (%p140) target = $region32
        $region31: #{tpu_custom_call.1} parent=27 // pred_region
          %143 = dma.done %s136, 128
        $region32: #{tpu_custom_call.1} parent=27 // pred_fallthru
          _
        %p144 = pneg %p36
        %p145 = pneg %p33
        %s146 = sand.u32 %s49, 1
        %s147 = scalar_lea.sflag [#allocation4], %s146
        %s148 = sand.u32 %s49, 1
        %s149 = smul.addr %s148, 8
        %s150 = scalar_lea.vmem [#allocation3], %s149
        %p151 = pneg %p62
        %p152 = pneg %p59
        %p153 = pneg %p88
        %p154 = pneg %p85
        %s155 = sand.u32 %s75, 1
        %s156 = scalar_lea.sflag [#allocation5], %s155
        %s157 = sand.u32 %s75, 1
        %s158 = smul.addr %s157, 8
        %s159 = scalar_lea.vmem [#allocation6], %s158
        %v160 = vld [vmem:[%s139] sm:$0xff]
        %v161 = vmul.f32 %v160, %v160
        %vm162 = vcmask 261120
        %v163 = vsel %vm162, %v161, 0.0
        %164 = vadd.xlane.f32.xlu0 %v163
        %v165 = vpop.xlane.xlu0 %164
        %s166 = sld [smem:[#allocation2]]
        %v167 = vrsqrt.pop %v165
        %v168 = vmin.f32 %v167, 100000.0
        %v169 = vstv %s166
        %v170 = vmul.f32 %v169, %v168
        %v171 = vmul.f32 %v160, %v170
        %172 = vst.msk [vmem:[%s159] sm:$0xff] %vm162, %v171
        %s173 = sand.u32 %s75, 1
        %s174 = scalar_lea.sflag [#allocation5], %s173
        %s175 = sand.u32 %s75, 1
        %s176 = smul.addr %s175, 8
        %s177 = scalar_lea.vmem [#allocation6], %s176
        // Predicated region
        $region33: #{tpu_custom_call.1} parent=27 // pred_check
          %p178 = pneg %p85
        $region34: #{tpu_custom_call.1} parent=27 // pred_check_branch
          %180 = sbr.rel (%p178) target = $region36
        $region35: #{tpu_custom_call.1} parent=27 // pred_region
          %s182 = ssub.s32 128, 128
          %183 = vsyncadd %s174, %s182
          %s184 = smul.addr %s20, 128
          %s185 = scalar_lea.hbm %s2, %s184
          %s187 = sshll.u32 %s177, 4
          %s188 = int_to_ptr.vmem [resolvable:$true] %s187
          %190 = dma.vmem_to_hbm [thread:$0]  %s188, 128, %s185, %s174
        $region36: #{tpu_custom_call.1} parent=27 // pred_fallthru
          _
      $region28: #{tpu_custom_call.1} parent=5 // pred_fallthru
        _
      %p191 = scmp.le.s32.totalorder 2, %s15
      // Predicated region
      $region37: #{tpu_custom_call.1} parent=5 // pred_check
        %p192 = pneg %p191
      $region38: #{tpu_custom_call.1} parent=5 // pred_check_branch
        %194 = sbr.rel (%p192) target = $region40
      $region39: #{tpu_custom_call.1} parent=5 // pred_region
        %s195 = ssub.s32 %s15, 2
        // Predicated region
        $region41: #{tpu_custom_call.1} parent=39 // pred_check
          %p196 = pneg %p91
        $region42: #{tpu_custom_call.1} parent=39 // pred_check_branch
          %198 = sbr.rel (%p196) target = $region44
        $region43: #{tpu_custom_call.1} parent=39 // pred_region
          %s199 = sand.u32 %s76, 1
          %s200 = scalar_lea.sflag [#allocation5], %s199
          %s201 = sand.u32 %s76, 1
          %s202 = smul.addr %s201, 8
          %s203 = scalar_lea.vmem [#allocation6], %s202
          %204 = dma.done %s200, 128
        $region44: #{tpu_custom_call.1} parent=39 // pred_fallthru
          _
      $region40: #{tpu_custom_call.1} parent=5 // pred_fallthru
        _
    $region6: #{tpu_custom_call.1} parent=1 // loop_footer
      %s19 = sadd.s32 1, %s15
    $region7: #{tpu_custom_call.1} parent=1 // loop_footer_branch
      %14 = sbr.rel target = $region3
    $region8: #{tpu_custom_call.1} parent=1 // loop_exit
      _
    %205 = vsyncpa [#allocation4], 1
    %s206 = scalar_lea.sflag [#allocation4], 1
    %207 = vsyncpa %s206, 1
    %208 = vsyncpa [#allocation5], 1
    %s209 = scalar_lea.sflag [#allocation5], 1
    %210 = vsyncpa %s209, 1

</llo_original>
